<compile_context>
chip_gen: v6e
topology: v6e:2x2x1
jax: 0.10.0
libtpu: 0.0.40
codegen_flags: <defaults>
</compile_context>

<pallas_src>
import jax
import jax.numpy as jnp
from jax import lax
from jax.experimental import pallas as pl
from jax.experimental.pallas import tpu as pltpu

_NEG = -1e30      # large-negative (finite) padding value for padded tag rows
_TINY = 1e-30     # clamp before log to avoid -inf from fully-underflowed columns
_LANE = 128       # batch tile (lane width)


def _crf_logz_kernel(feat_ref, mask_ref, exp_trans_t_ref, colmax_ref,
                     out_ref, alphas_ref):
    t = pl.program_id(1)

    @pl.when(t == 0)
    def _init():
        # alphas_0 = emissions at t=0
        alphas_ref[...] = feat_ref[0]                                # (Kp, Bp_tile)

    @pl.when(t > 0)
    def _step():
        alphas = alphas_ref[...]                                     # (Kp, B)
        m = jnp.max(alphas, axis=0, keepdims=True)                   # (1, B)
        ea = jnp.exp(alphas - m)                                     # (Kp, B)
        # (Kp_dst, Kp_src) @ (Kp_src, B) on the MXU, full f32 precision.
        mm = jnp.dot(exp_trans_t_ref[...], ea,
                     preferred_element_type=jnp.float32,
                     precision=lax.Precision.HIGHEST)                # (Kp, B)
        new_alphas = (jnp.log(jnp.maximum(mm, _TINY))
                      + m + colmax_ref[...] + feat_ref[0])           # (Kp, B)
        msk = mask_ref[0]                                            # (1, B)
        alphas_ref[...] = jnp.where(msk > 0.5, new_alphas, alphas)

    @pl.when(t == pl.num_programs(1) - 1)
    def _finalize():
        alphas = alphas_ref[...]
        m = jnp.max(alphas, axis=0, keepdims=True)                   # (1, B)
        out_ref[...] = m + jnp.log(
            jnp.sum(jnp.exp(alphas - m), axis=0, keepdims=True))     # (1, B)


def _crf_log_partition(batch_feat, batch_mask, transitions):
    """Log-partition (denominator) via the Pallas kernel. Returns (B,)."""
    B, T, K = batch_feat.shape
    Kp = max(8, ((K + 7) // 8) * 8)
    Bp = ((B + _LANE - 1) // _LANE) * _LANE

    # ---- glue: kernel layouts (time-major, batch on lanes) ----
    feat_t = jnp.transpose(batch_feat.astype(jnp.float32), (1, 2, 0))     # (T, K, B)
    feat_t = jnp.pad(feat_t, ((0, 0), (0, Kp - K), (0, 0)),
                     constant_values=_NEG)                                 # pad tags
    feat_t = jnp.pad(feat_t, ((0, 0), (0, 0), (0, Bp - B)),
                     constant_values=0.0)                                  # pad batch

    mask_t = jnp.transpose(batch_mask.astype(jnp.float32), (1, 0))[:, None, :]  # (T,1,B)
    mask_t = jnp.pad(mask_t, ((0, 0), (0, 0), (0, Bp - B)), constant_values=1.0)

    trans = transitions.astype(jnp.float32)                                # (K, K)
    colmax = jnp.max(trans, axis=0)                                        # (K,)
    exp_trans_t = jnp.exp(trans - colmax[None, :]).T                       # (K, K) [dst, src]
    exp_trans_t = jnp.pad(exp_trans_t, ((0, Kp - K), (0, Kp - K)))         # zeros = -inf trans
    colmax_col = jnp.pad(colmax, (0, Kp - K))[:, None]                     # (Kp, 1)

    out = pl.pallas_call(
        _crf_logz_kernel,
        out_shape=jax.ShapeDtypeStruct((1, Bp), jnp.float32),
        grid_spec=pltpu.PrefetchScalarGridSpec(
            num_scalar_prefetch=0,
            grid=(Bp // _LANE, T),
            in_specs=[
                pl.BlockSpec((1, Kp, _LANE), lambda b, t: (t, 0, b)),   # feat slab
                pl.BlockSpec((1, 1, _LANE), lambda b, t: (t, 0, b)),    # mask slab
                pl.BlockSpec((Kp, Kp), lambda b, t: (0, 0)),            # exp(trans).T
                pl.BlockSpec((Kp, 1), lambda b, t: (0, 0)),             # colmax
            ],
            out_specs=pl.BlockSpec((1, _LANE), lambda b, t: (0, b)),
            scratch_shapes=[pltpu.VMEM((Kp, _LANE), jnp.float32)],      # alphas carry
        ),
        compiler_params=pltpu.CompilerParams(
            dimension_semantics=("parallel", "arbitrary")),
    )(feat_t, mask_t, exp_trans_t, colmax_col)

    return out[0, :B]                                                      # (B,)


def _gold_score(batch_feat, batch_tag, batch_mask, transitions):
    """Gold-path (numerator) score, fully parallel over T -> plain JAX gathers."""
    B, T, K = batch_feat.shape
    feat = batch_feat.astype(jnp.float32)
    maskf = batch_mask.astype(jnp.float32)
    tag = batch_tag.astype(jnp.int32)
    trans = transitions.astype(jnp.float32)

    em = jnp.take_along_axis(feat, tag[..., None], axis=2)[..., 0]        # (B, T)
    if T == 1:
        return em[:, 0]

    # last valid (masked-on) index strictly before step i (step 0 is always on)
    on_idx = jnp.arange(T, dtype=jnp.int32)[None, :] * batch_mask.astype(jnp.int32)
    latest = lax.cummax(on_idx, axis=1)                                    # (B, T)
    prev_idx = jnp.concatenate(
        [jnp.zeros((B, 1), jnp.int32), latest[:, :-1]], axis=1)           # (B, T)
    prev_tag = jnp.take_along_axis(tag, prev_idx, axis=1)                  # (B, T)
    tr = trans[prev_tag, tag]                                              # (B, T)

    return em[:, 0] + jnp.sum((em[:, 1:] + tr[:, 1:]) * maskf[:, 1:], axis=1)


def crf_forward(batch_feat, batch_tag, batch_mask, transitions, reduction="none"):
    """batch_first CRF log-likelihood. batch_feat (B,T,K), batch_tag (B,T), batch_mask (B,T)."""
    score = _gold_score(batch_feat, batch_tag, batch_mask, transitions)
    log_z = _crf_log_partition(batch_feat, batch_mask, transitions)
    res = score - log_z
    if reduction == "none":
        return res
    if reduction == "sum":
        return res.sum()
    if reduction == "mean":
        return res.mean()
    if reduction == "token_mean":
        return res.sum() / batch_mask.astype(jnp.float32).sum()
    raise ValueError("invalid reduction %s" % reduction)


def crf_forward_ref(batch_feat, batch_tag, batch_mask, transitions):
    """Pure-JAX reference mirroring the PyTorch CRF.forward (reduction='none')."""
    B, T, K = batch_feat.shape
    feat = batch_feat.astype(jnp.float32)
    trans = transitions.astype(jnp.float32)
    maskf = batch_mask.astype(jnp.float32)

    score = feat[jnp.arange(B), 0, batch_tag[:, 0]]
    last = batch_tag[:, 0]
    for i in range(1, T):
        m = maskf[:, i]
        score = score + feat[jnp.arange(B), i, batch_tag[:, i]] * m
        score = score + trans[last, batch_tag[:, i]] * m
        last = jnp.where(batch_mask[:, i] > 0, batch_tag[:, i], last)

    alphas = feat[:, 0, :]
    for i in range(1, T):
        s = alphas[:, :, None] + trans[None, :, :] + feat[:, i, None, :]
        new = jax.scipy.special.logsumexp(s, axis=1)
        alphas = jnp.where(batch_mask[:, i][:, None] > 0, new, alphas)
    log_z = jax.scipy.special.logsumexp(alphas, axis=1)
    return score - log_z


if __name__ == "__main__":
    # TODO(synk): viterbi decode() (data-dependent Python backtracking) is not implemented as a kernel.
    B, T, K = 4, 8, 8  # batch, seq_length, tags_num
    init_range = 0.01

    key = jax.random.PRNGKey(0)
    k_feat, k_tag, k_len, k_trans = jax.random.split(key, 4)

    batch_feat = jax.random.normal(k_feat, (B, T, K), dtype=jnp.float32)
    batch_tag = jax.random.randint(k_tag, (B, T), 0, K, dtype=jnp.int32)
    # random lengths; first timestep mask must be all on
    lengths = jax.random.randint(k_len, (B,), 1, T + 1)
    batch_mask = (jnp.arange(T)[None, :] < lengths[:, None]).astype(jnp.int32)

    # deterministic parameter init: uniform(-init_range, init_range), like nn.init.uniform_
    transitions = jax.random.uniform(
        k_trans, (K, K), minval=-init_range, maxval=init_range, dtype=jnp.float32
    )

    out = crf_forward(batch_feat, batch_tag, batch_mask, transitions, reduction="none")
    out = jax.block_until_ready(out)

    ref = crf_forward_ref(batch_feat, batch_tag, batch_mask, transitions)
    assert out.shape == (B,)
    assert jnp.allclose(out, ref, atol=1e-3, rtol=1e-3), (out, ref)

    print("KERNEL_OK")
</pallas_src>

<mosaic_0001>
module attributes {stable_mosaic.version = 11 : i64} {
  func.func @_crf_logz_kernel(%arg0: i32, %arg1: i32, %arg2: memref<1x8x128xf32, #tpu.memory_space<vmem>>, %arg3: memref<1x1x128xf32, #tpu.memory_space<vmem>>, %arg4: memref<8x8xf32, #tpu.memory_space<vmem>>, %arg5: memref<8x1xf32, #tpu.memory_space<vmem>>, %arg6: memref<1x128xf32, #tpu.memory_space<vmem>>, %arg7: memref<8x128xf32, #tpu.memory_space<vmem>>) attributes {dimension_semantics = [#tpu.dimension_semantics<parallel>, #tpu.dimension_semantics<arbitrary>], iteration_bounds = array<i64: 1, 8>, scalar_prefetch = 0 : i64, scratch_operands = 1 : i64, tpu.core_type = #tpu.core_type<tc>, window_params = [{transform_indices = @transform_0, window_bounds = array<i64: 1, 8, 128>}, {transform_indices = @transform_1, window_bounds = array<i64: 1, 1, 128>}, {pipeline_mode = #tpu.pipeline_mode<synchronous>, transform_indices = @transform_2, window_bounds = array<i64: 8, 8>}, {pipeline_mode = #tpu.pipeline_mode<synchronous>, transform_indices = @transform_3, window_bounds = array<i64: 8, 1>}, {transform_indices = @transform_4, window_bounds = array<i64: 1, 128>}]} {
    %c0_i32 = arith.constant 0 : i32
    %0 = arith.cmpi eq, %arg1, %c0_i32 : i32
    %1 = arith.extui %0 : i1 to i32
    %c0_i32_0 = arith.constant 0 : i32
    %2 = arith.cmpi ne, %1, %c0_i32_0 : i32
    scf.if %2 {
      %c0 = arith.constant 0 : index
      %c0_4 = arith.constant 0 : index
      %c0_5 = arith.constant 0 : index
      %9 = vector.load %arg2[%c0, %c0_4, %c0_5] : memref<1x8x128xf32, #tpu.memory_space<vmem>>, vector<1x8x128xf32>
      %10 = vector.shape_cast %9 : vector<1x8x128xf32> to vector<8x128xf32>
      %c0_6 = arith.constant 0 : index
      %c0_7 = arith.constant 0 : index
      %11 = vector.load %arg7[%c0_6, %c0_7] : memref<8x128xf32, #tpu.memory_space<vmem>>, vector<8x128xf32>
      tpu.vector_store %arg7[%c0_6, %c0_7], %10 {strides = array<i32>} : memref<8x128xf32, #tpu.memory_space<vmem>>, vector<8x128xf32>,
    } else {
    }
    %c0_i32_1 = arith.constant 0 : i32
    %3 = arith.cmpi sgt, %arg1, %c0_i32_1 : i32
    %4 = arith.extui %3 : i1 to i32
    %c0_i32_2 = arith.constant 0 : i32
    %5 = arith.cmpi ne, %4, %c0_i32_2 : i32
    scf.if %5 {
      %c0 = arith.constant 0 : index
      %c0_4 = arith.constant 0 : index
      %9 = vector.load %arg7[%c0, %c0_4] : memref<8x128xf32, #tpu.memory_space<vmem>>, vector<8x128xf32>
      %cst = arith.constant dense<0xFF800000> : vector<128xf32>
      %10 = vector.multi_reduction <maximumf>, %9, %cst [0] : vector<8x128xf32> to vector<128xf32>
      %11 = vector.shape_cast %10 : vector<128xf32> to vector<1x128xf32>
      %12 = vector.broadcast %11 : vector<1x128xf32> to vector<8x128xf32>
      %13 = arith.subf %9, %12 : vector<8x128xf32>
      %14 = math.exp %13 : vector<8x128xf32>
      %c0_5 = arith.constant 0 : index
      %c0_6 = arith.constant 0 : index
      %15 = vector.load %arg4[%c0_5, %c0_6] : memref<8x8xf32, #tpu.memory_space<vmem>>, vector<8x8xf32>
      %cst_7 = arith.constant dense<0.000000e+00> : vector<8x128xf32>
      %16 = tpu.matmul %15, %14, %cst_7 {dimension_numbers = #tpu.dot_dimension_numbers<[1], [0], [0], [1], [0, 0, 1, 1], [], []>, precision = #tpu.contract_precision<fp32>} : vector<8x8xf32>, vector<8x128xf32>, vector<8x128xf32> -> vector<8x128xf32>
      %cst_8 = arith.constant 1.000000e-30 : f32
      %17 = vector.broadcast %cst_8 : f32 to vector<8x128xf32>
      %18 = arith.maximumf %16, %17 : vector<8x128xf32>
      %19 = math.log %18 : vector<8x128xf32>
      %20 = vector.broadcast %11 : vector<1x128xf32> to vector<8x128xf32>
      %21 = arith.addf %19, %20 : vector<8x128xf32>
      %c0_9 = arith.constant 0 : index
      %c0_10 = arith.constant 0 : index
      %22 = vector.load %arg5[%c0_9, %c0_10] : memref<8x1xf32, #tpu.memory_space<vmem>>, vector<8x1xf32>
      %23 = vector.broadcast %22 : vector<8x1xf32> to vector<8x128xf32>
      %24 = arith.addf %21, %23 : vector<8x128xf32>
      %c0_11 = arith.constant 0 : index
      %c0_12 = arith.constant 0 : index
      %c0_13 = arith.constant 0 : index
      %25 = vector.load %arg2[%c0_11, %c0_12, %c0_13] : memref<1x8x128xf32, #tpu.memory_space<vmem>>, vector<1x8x128xf32>
      %26 = vector.shape_cast %25 : vector<1x8x128xf32> to vector<8x128xf32>
      %27 = arith.addf %24, %26 : vector<8x128xf32>
      %c0_14 = arith.constant 0 : index
      %c0_15 = arith.constant 0 : index
      %c0_16 = arith.constant 0 : index
      %28 = vector.load %arg3[%c0_14, %c0_15, %c0_16] : memref<1x1x128xf32, #tpu.memory_space<vmem>>, vector<1x1x128xf32>
      %29 = vector.shape_cast %28 : vector<1x1x128xf32> to vector<1x128xf32>
      %cst_17 = arith.constant 5.000000e-01 : f32
      %30 = vector.broadcast %cst_17 : f32 to vector<1x128xf32>
      %31 = arith.cmpf ogt, %29, %30 : vector<1x128xf32>
      %32 = vector.shape_cast %31 : vector<1x128xi1> to vector<1x128xi1>
      %33 = vector.broadcast %32 : vector<1x128xi1> to vector<8x128xi1>
      %34 = arith.select %33, %27, %9 : vector<8x128xi1>, vector<8x128xf32>
      %c0_18 = arith.constant 0 : index
      %c0_19 = arith.constant 0 : index
      %35 = vector.load %arg7[%c0_18, %c0_19] : memref<8x128xf32, #tpu.memory_space<vmem>>, vector<8x128xf32>
      tpu.vector_store %arg7[%c0_18, %c0_19], %34 {strides = array<i32>} : memref<8x128xf32, #tpu.memory_space<vmem>>, vector<8x128xf32>,
    } else {
    }
    %c7_i32 = arith.constant 7 : i32
    %6 = arith.cmpi eq, %arg1, %c7_i32 : i32
    %7 = arith.extui %6 : i1 to i32
    %c0_i32_3 = arith.constant 0 : i32
    %8 = arith.cmpi ne, %7, %c0_i32_3 : i32
    scf.if %8 {
      %c0 = arith.constant 0 : index
      %c0_4 = arith.constant 0 : index
      %9 = vector.load %arg7[%c0, %c0_4] : memref<8x128xf32, #tpu.memory_space<vmem>>, vector<8x128xf32>
      %cst = arith.constant dense<0xFF800000> : vector<128xf32>
      %10 = vector.multi_reduction <maximumf>, %9, %cst [0] : vector<8x128xf32> to vector<128xf32>
      %11 = vector.shape_cast %10 : vector<128xf32> to vector<1x128xf32>
      %12 = vector.broadcast %11 : vector<1x128xf32> to vector<8x128xf32>
      %13 = arith.subf %9, %12 : vector<8x128xf32>
      %14 = math.exp %13 : vector<8x128xf32>
      %cst_5 = arith.constant dense<0.000000e+00> : vector<128xf32>
      %15 = vector.multi_reduction <add>, %14, %cst_5 [0] : vector<8x128xf32> to vector<128xf32>
      %16 = vector.shape_cast %15 : vector<128xf32> to vector<1x128xf32>
      %17 = math.log %16 : vector<1x128xf32>
      %18 = arith.addf %11, %17 : vector<1x128xf32>
      %c0_6 = arith.constant 0 : index
      %c0_7 = arith.constant 0 : index
      %19 = vector.load %arg6[%c0_6, %c0_7] : memref<1x128xf32, #tpu.memory_space<vmem>>, vector<1x128xf32>
      tpu.vector_store %arg6[%c0_6, %c0_7], %18 {strides = array<i32>} : memref<1x128xf32, #tpu.memory_space<vmem>>, vector<1x128xf32>,
    } else {
    }
    return
  }
  func.func @transform_0(%arg0: i32, %arg1: i32) -> (i32, i32, i32) {
    %c0_i32 = arith.constant 0 : i32
    %c0_i32_0 = arith.constant 0 : i32
    return %arg1, %c0_i32, %arg0 : i32, i32, i32
  }
  func.func @transform_1(%arg0: i32, %arg1: i32) -> (i32, i32, i32) {
    %c0_i32 = arith.constant 0 : i32
    %c0_i32_0 = arith.constant 0 : i32
    return %arg1, %c0_i32, %arg0 : i32, i32, i32
  }
  func.func @transform_2(%arg0: i32, %arg1: i32) -> (i32, i32) {
    %c0_i32 = arith.constant 0 : i32
    %c0_i32_0 = arith.constant 0 : i32
    %c0_i32_1 = arith.constant 0 : i32
    return %c0_i32, %c0_i32_0 : i32, i32
  }
  func.func @transform_3(%arg0: i32, %arg1: i32) -> (i32, i32) {
    %c0_i32 = arith.constant 0 : i32
    %c0_i32_0 = arith.constant 0 : i32
    %c0_i32_1 = arith.constant 0 : i32
    return %c0_i32, %c0_i32_0 : i32, i32
  }
  func.func @transform_4(%arg0: i32, %arg1: i32) -> (i32, i32) {
    %c0_i32 = arith.constant 0 : i32
    %c0_i32_0 = arith.constant 0 : i32
    return %c0_i32, %arg0 : i32, i32
  }
}

</mosaic_0001>

<llo_original>
// kernel: tpu_custom_call.1
$region0: #{tpu_custom_call.1}
  #allocation0 [shape = 'u32[]', space=smem, size = 0x4, offset = 0x4, fixed_abs, tag = 'smem constant byte address 0x4 - core index']
  #allocation1 [shape = 'u32[144,128]{1,0:T(1,128)}', space=vmem, size = 0x12000, scoped, tag = 'internal scratch']
  #allocation2 [shape = 'f32[8,128]{1,0:T(8,128)}', space=vmem, size = 0x1000, scoped, tag = 'scratch operand']
  %s0 = inlined_call_operand.hbm [shape: f32[8,8,128], index: 0, kind: input, shape index: {}]
  %s1 = inlined_call_operand.vmem [shape: f32[8,1,128], index: 1, kind: input, shape index: {}]
  %s2 = inlined_call_operand.hbm [shape: f32[8,8], index: 2, kind: input, shape index: {}]
  %s3 = inlined_call_operand.vmem [shape: f32[8,1], index: 3, kind: input, shape index: {}]
  %s4 = inlined_call_operand.hbm [shape: f32[1,128], index: 4, kind: output, shape index: {}]
  %s5 = sld [smem:[#allocation0]]
  $region69: #{tpu_custom_call.1} parent=0
    _
  %s7 = ssub.s32 1, %s5
  %s8 = scalar_select 0, %s7, %s5
  $region1: #{tpu_custom_call.1} parent=0
    #allocation3 [shape = 'u8[8192]{0}', space=vmem, size = 0x2000, scoped, tag = 'input window, operand 0']
    #allocation4 [shape = 's32[2]{0}', space=sflag, size = 0x8, scoped, tag = 'scoped memory for tpu_custom_call.1']
    #allocation5 [shape = 's32[2]{0}', space=sflag, size = 0x8, scoped, tag = 'scoped memory for tpu_custom_call.1']
    #allocation6 [shape = 'u8[4096]{0}', space=vmem, size = 0x1000, scoped, tag = 'input window, operand 2, single buffered']
    #allocation7 [shape = 's32[1]{0}', space=sflag, size = 0x4, scoped, tag = 'scoped memory for tpu_custom_call.1']
    #allocation8 [shape = 'u8[512]{0}', space=vmem, size = 0x400, scoped, tag = 'output window, operand 0, single buffered']
    %9 = vsyncpa [#allocation4], 0
    %s10 = scalar_lea.sflag [#allocation4], 1
    %11 = vsyncpa %s10, 0
    %12 = vsyncpa [#allocation7], 0
    %13 = vsyncpa [#allocation5], 0
    loop: start=0, step=1, limit=10
    $region2: #{tpu_custom_call.1} parent=1 // loop_pre_header
      _
    $region3: #{tpu_custom_call.1} parent=1 // loop_header
      %s15 = sphi 0, %s19
      %p16 = scmp.ge.s32.totalorder %s15, 10
      %s22 = sphi 0, %s34
      %s23 = sphi 0, %s30
      %s24 = sphi 0, %s22
      %s25 = sphi 0, %s23
      %s26 = sphi 0, %s24
      %s27 = sphi 0, %s25
      %s39 = sphi 0, %s41
      %s42 = sphi 0, %s39
      %s43 = sphi 0, %s42
      %s59 = sphi 0, %s43
      %s67 = sphi 0, %s69
      %s70 = sphi 0, %s67
      %s71 = sphi 0, %s70
      %s87 = sphi 0, %s71
      %s91 = sphi 0, %s91
      %s93 = sphi 0, %s91
      %s94 = sphi 0, %s93
      %s108 = sphi 0, %s94
      %s112 = sphi 0, %s112
      %s114 = sphi 0, %s112
      %s115 = sphi 0, %s114
      %s129 = sphi 0, %s115
      %s135 = sphi 0, %s137
      %s138 = sphi 0, %s135
      %s139 = sphi 0, %s138
      %s155 = sphi 0, %s139
    $region4: #{tpu_custom_call.1} parent=1 // loop_header_branch
      %18 = sbr.rel (%p16) target = $region8
    $region5: #{tpu_custom_call.1} parent=1 // loop_body
      %s20 = ssub.s32 %s15, 1
      %s21 = ssub.s32 %s15, 2
      %s28 = sadd.s32 1, %s23
      %p29 = scmp.ge.s32.totalorder %s28, 8
      %s30 = scalar_select %p29, 0, %s28
      %s31 = sadd.s32 1, %s22
      %s32 = scalar_select %p29, %s31, %s22
      %p33 = scmp.ge.s32.totalorder %s32, 1
      %s34 = scalar_select %p33, 0, %s32
      %s35 = ssub.s32 %s23, %s30
      %s36 = ssub.s32 %s22, %s34
      %s37 = sor.u32 %s35, %s36
      %p38 = scmp.eq.s32.totalorder %s37, 0
      %s40 = sadd.s32 %s39, 1
      %s41 = scalar_select %p38, %s39, %s40
      %p44 = pneg %p38
      %p45 = scmp.eq.s32.totalorder %s15, 7
      %p46 = por %p44, %p45
      %p47 = scmp.ne.s32.totalorder %s39, %s42
      %p48 = scmp.eq.s32.totalorder %s15, 0
      %p49 = por %p47, %p48
      %p50 = scmp.ne.s32.totalorder %s39, %s42
      %p51 = scmp.eq.s32.totalorder %s20, 7
      %p52 = por %p50, %p51
      %p53 = scmp.ne.s32.totalorder %s42, %s43
      %p54 = scmp.eq.s32.totalorder %s20, 0
      %p55 = por %p53, %p54
      %p56 = scmp.ne.s32.totalorder %s42, %s43
      %p57 = scmp.eq.s32.totalorder %s21, 7
      %p58 = por %p56, %p57
      %p60 = scmp.ne.s32.totalorder %s43, %s59
      %p61 = scmp.eq.s32.totalorder %s21, 0
      %p62 = por %p60, %p61
      %s63 = ssub.s32 %s23, %s30
      %s64 = ssub.s32 %s22, %s34
      %s65 = sor.u32 %s63, %s64
      %p66 = scmp.eq.s32.totalorder %s65, 0
      %s68 = sadd.s32 %s67, 1
      %s69 = scalar_select %p66, %s67, %s68
      %p72 = pneg %p66
      %p73 = scmp.eq.s32.totalorder %s15, 7
      %p74 = por %p72, %p73
      %p75 = scmp.ne.s32.totalorder %s67, %s70
      %p76 = scmp.eq.s32.totalorder %s15, 0
      %p77 = por %p75, %p76
      %p78 = scmp.ne.s32.totalorder %s67, %s70
      %p79 = scmp.eq.s32.totalorder %s20, 7
      %p80 = por %p78, %p79
      %p81 = scmp.ne.s32.totalorder %s70, %s71
      %p82 = scmp.eq.s32.totalorder %s20, 0
      %p83 = por %p81, %p82
      %p84 = scmp.ne.s32.totalorder %s70, %s71
      %p85 = scmp.eq.s32.totalorder %s21, 7
      %p86 = por %p84, %p85
      %p88 = scmp.ne.s32.totalorder %s71, %s87
      %p89 = scmp.eq.s32.totalorder %s21, 0
      %p90 = por %p88, %p89
      %s92 = sadd.s32 %s91, 1
      %p95 = scmp.eq.s32.totalorder %s15, 7
      %p96 = scmp.ne.s32.totalorder %s91, %s93
      %p97 = scmp.eq.s32.totalorder %s15, 0
      %p98 = por %p96, %p97
      %p99 = scmp.ne.s32.totalorder %s91, %s93
      %p100 = scmp.eq.s32.totalorder %s20, 7
      %p101 = por %p99, %p100
      %p102 = scmp.ne.s32.totalorder %s93, %s94
      %p103 = scmp.eq.s32.totalorder %s20, 0
      %p104 = por %p102, %p103
      %p105 = scmp.ne.s32.totalorder %s93, %s94
      %p106 = scmp.eq.s32.totalorder %s21, 7
      %p107 = por %p105, %p106
      %p109 = scmp.ne.s32.totalorder %s94, %s108
      %p110 = scmp.eq.s32.totalorder %s21, 0
      %p111 = por %p109, %p110
      %s113 = sadd.s32 %s112, 1
      %p116 = scmp.eq.s32.totalorder %s15, 7
      %p117 = scmp.ne.s32.totalorder %s112, %s114
      %p118 = scmp.eq.s32.totalorder %s15, 0
      %p119 = por %p117, %p118
      %p120 = scmp.ne.s32.totalorder %s112, %s114
      %p121 = scmp.eq.s32.totalorder %s20, 7
      %p122 = por %p120, %p121
      %p123 = scmp.ne.s32.totalorder %s114, %s115
      %p124 = scmp.eq.s32.totalorder %s20, 0
      %p125 = por %p123, %p124
      %p126 = scmp.ne.s32.totalorder %s114, %s115
      %p127 = scmp.eq.s32.totalorder %s21, 7
      %p128 = por %p126, %p127
      %p130 = scmp.ne.s32.totalorder %s115, %s129
      %p131 = scmp.eq.s32.totalorder %s21, 0
      %p132 = por %p130, %p131
      %s133 = ssub.s32 %s22, %s34
      %p134 = scmp.eq.s32.totalorder %s133, 0
      %s136 = sadd.s32 %s135, 1
      %s137 = scalar_select %p134, %s135, %s136
      %p140 = pneg %p134
      %p141 = scmp.eq.s32.totalorder %s15, 7
      %p142 = por %p140, %p141
      %p143 = scmp.ne.s32.totalorder %s135, %s138
      %p144 = scmp.eq.s32.totalorder %s15, 0
      %p145 = por %p143, %p144
      %p146 = scmp.ne.s32.totalorder %s135, %s138
      %p147 = scmp.eq.s32.totalorder %s20, 7
      %p148 = por %p146, %p147
      %p149 = scmp.ne.s32.totalorder %s138, %s139
      %p150 = scmp.eq.s32.totalorder %s20, 0
      %p151 = por %p149, %p150
      %p152 = scmp.ne.s32.totalorder %s138, %s139
      %p153 = scmp.eq.s32.totalorder %s21, 7
      %p154 = por %p152, %p153
      %p156 = scmp.ne.s32.totalorder %s139, %s155
      %p157 = scmp.eq.s32.totalorder %s21, 0
      %p158 = por %p156, %p157
      %p159 = scmp.le.s32.totalorder 1, %s15
      %p160 = scmp.lt.s32.totalorder %s15, 9
      %p161 = pnand %p159, %p160
      %p162 = pneg %p161
      // Predicated region
      $region9: #{tpu_custom_call.1} parent=5 // pred_check
        _
      $region10: #{tpu_custom_call.1} parent=5 // pred_check_branch
        %164 = sbr.rel (%p161) target = $region12
      $region11: #{tpu_custom_call.1} parent=5 // pred_region
        %s165 = ssub.s32 %s15, 1
        // Predicated region
        $region13: #{tpu_custom_call.1} parent=11 // pred_check
          %p166 = pneg %p104
        $region14: #{tpu_custom_call.1} parent=11 // pred_check_branch
          %168 = sbr.rel (%p166) target = $region16
        $region15: #{tpu_custom_call.1} parent=11 // pred_region
          %s170 = ssub.s32 128, 128
          %171 = vsyncadd [#allocation7], %s170
          %s173 = sshll.u32 [#allocation6], 4
          %s174 = int_to_ptr.vmem [resolvable:$true] %s173
          %176 = dma.hbm_to_vmem [thread:$0]  %s2, 128, %s174, [#allocation7]
        $region16: #{tpu_custom_call.1} parent=11 // pred_fallthru
          _
        // Predicated region
        $region17: #{tpu_custom_call.1} parent=11 // pred_check
          %p177 = pneg %p125
        $region18: #{tpu_custom_call.1} parent=11 // pred_check_branch
          %179 = sbr.rel (%p177) target = $region20
        $region19: #{tpu_custom_call.1} parent=11 // pred_region
          _
        $region20: #{tpu_custom_call.1} parent=11 // pred_fallthru
          _
      $region12: #{tpu_custom_call.1} parent=5 // pred_fallthru
        _
      %p180 = scmp.lt.s32.totalorder %s15, 8
      // Predicated region
      $region21: #{tpu_custom_call.1} parent=5 // pred_check
        %p181 = pneg %p180
      $region22: #{tpu_custom_call.1} parent=5 // pred_check_branch
        %183 = sbr.rel (%p181) target = $region24
      $region23: #{tpu_custom_call.1} parent=5 // pred_region
        // Predicated region
        $region25: #{tpu_custom_call.1} parent=23 // pred_check
          %p184 = pneg %p49
        $region26: #{tpu_custom_call.1} parent=23 // pred_check_branch
          %186 = sbr.rel (%p184) target = $region28
        $region27: #{tpu_custom_call.1} parent=23 // pred_region
          %s187 = sand.u32 %s39, 1
          %s188 = scalar_lea.sflag [#allocation4], %s187
          %s189 = sand.u32 %s39, 1
          %s190 = smul.addr %s189, 8
          %s191 = scalar_lea.vmem [#allocation3], %s190
          %s193 = ssub.s32 128, 128
          %194 = vsyncadd %s188, %s193
          %s195 = sadd.s32 %s22, %s23
          %s196 = smul.addr %s195, 128
          %s197 = scalar_lea.hbm %s0, %s196
          %s199 = sshll.u32 %s191, 4
          %s200 = int_to_ptr.vmem [resolvable:$true] %s199
          %202 = dma.hbm_to_vmem [thread:$0]  %s197, 128, %s200, %s188
        $region28: #{tpu_custom_call.1} parent=23 // pred_fallthru
          _
        // Predicated region
        $region29: #{tpu_custom_call.1} parent=23 // pred_check
          %p203 = pneg %p77
        $region30: #{tpu_custom_call.1} parent=23 // pred_check_branch
          %205 = sbr.rel (%p203) target = $region32
        $region31: #{tpu_custom_call.1} parent=23 // pred_region
          %p206 = scmp.lt.s32.totalorder %s23, 7
          %s207 = scalar_select %p206, %s23, 7
          %p208 = scmp.lt.s32.totalorder %s22, 0
          %s209 = scalar_select %p208, %s22, 0
          %s210 = sadd.s32 %s209, %s207
          %s211 = scalar_lea.vmem %s1, %s210
        $region32: #{tpu_custom_call.1} parent=23 // pred_fallthru
          _
      $region24: #{tpu_custom_call.1} parent=5 // pred_fallthru
        _
      %p212 = scmp.le.s32.totalorder 1, %s15
      %p213 = scmp.lt.s32.totalorder %s15, 9
      %p214 = pnand %p212, %p213
      %p215 = pneg %p214
      // Predicated region
      $region33: #{tpu_custom_call.1} parent=5 // pred_check
        _
      $region34: #{tpu_custom_call.1} parent=5 // pred_check_branch
        %217 = sbr.rel (%p214) target = $region36
      $region35: #{tpu_custom_call.1} parent=5 // pred_region
        %s218 = ssub.s32 %s15, 1
        %s219 = sand.u32 %s42, 1
        %s220 = scalar_lea.sflag [#allocation4], %s219
        %s221 = sand.u32 %s42, 1
        %s222 = smul.addr %s221, 8
        %s223 = scalar_lea.vmem [#allocation3], %s222
        // Predicated region
        $region37: #{tpu_custom_call.1} parent=35 // pred_check
          %p224 = pneg %p55
        $region38: #{tpu_custom_call.1} parent=35 // pred_check_branch
          %226 = sbr.rel (%p224) target = $region40
        $region39: #{tpu_custom_call.1} parent=35 // pred_region
          %227 = dma.done %s220, 128
        $region40: #{tpu_custom_call.1} parent=35 // pred_fallthru
          _
        // Predicated region
        $region41: #{tpu_custom_call.1} parent=35 // pred_check
          %p228 = pneg %p104
        $region42: #{tpu_custom_call.1} parent=35 // pred_check_branch
          %230 = sbr.rel (%p228) target = $region44
        $region43: #{tpu_custom_call.1} parent=35 // pred_region
          %231 = dma.done [#allocation7], 128
        $region44: #{tpu_custom_call.1} parent=35 // pred_fallthru
          _
        %s232 = sand.u32 %s42, 1
        %s233 = scalar_lea.sflag [#allocation4], %s232
        %s234 = sand.u32 %s42, 1
        %s235 = smul.addr %s234, 8
        %s236 = scalar_lea.vmem [#allocation3], %s235
        %p237 = pneg %p55
        %p238 = pneg %p52
        %p239 = scmp.lt.s32.totalorder %s25, 7
        %s240 = scalar_select %p239, %s25, 7
        %p241 = scmp.lt.s32.totalorder %s24, 0
        %s242 = scalar_select %p241, %s24, 0
        %s243 = sadd.s32 %s242, %s240
        %s244 = scalar_lea.vmem %s1, %s243
        %p245 = pneg %p83
        %p246 = pneg %p80
        %p247 = pneg %p104
        %p248 = pneg %p101
        %p249 = pneg %p125
        %p250 = pneg %p122
        %p251 = pneg %p151
        %p252 = pneg %p148
        %p253 = scmp.lt.s32.totalorder %s25, 7
        %s254 = scalar_select %p253, %s25, 7
        %p255 = scmp.lt.s32.totalorder %s24, 0
        %s256 = scalar_select %p255, %s24, 0
        %s257 = sadd.s32 %s256, %s254
        %s258 = scalar_lea.vmem %s1, %s257
        %p259 = scmp.eq.s32.totalorder %s25, 0
        // Predicated region
        $region45: #{tpu_custom_call.1} parent=35 // pred_check
          %p260 = pneg %p259
        $region46: #{tpu_custom_call.1} parent=35 // pred_check_branch
          %262 = sbr.rel (%p260) target = $region48
        $region47: #{tpu_custom_call.1} parent=35 // pred_region
          %v263 = vld [vmem:[%s223] sm:$0xff]
          %264 = vst [vmem:[#allocation2] sm:$0xff] %v263
        $region48: #{tpu_custom_call.1} parent=35 // pred_fallthru
          _
        %p265 = scmp.gt.s32.totalorder %s25, 0
        // Predicated region
        $region49: #{tpu_custom_call.1} parent=35 // pred_check
          %p266 = pneg %p265
        $region50: #{tpu_custom_call.1} parent=35 // pred_check_branch
          %268 = sbr.rel (%p266) target = $region52
        $region51: #{tpu_custom_call.1} parent=35 // pred_region
          %v269 = vld [vmem:[#allocation2] sm:$0xff]
          %v270 = vrot.slane %v269, 4
          %v271 = vmax.f32 %v269, %v270
          %v272 = vrot.slane %v271, 2
          %v273 = vmax.f32 %v271, %v272
          %v274 = vrot.slane %v273, 1
          %v275 = vmax.f32 %v273, %v274
          %v276 = vsub.f32 %v269, %v275
          %v277 = vmul.f32 %v276, 1.442695
          %v278 = vpow.pop %v277
          %v279 = vld [vmem:[#allocation6] sm:$0xff]
          %vm280 = vcmask 64512
          %v282 = vsel %vm280, %v279, 0
          %284 = vmatprep.subr.mxu0 0.0
          %285 = vmatpush1.msra.mxu0 0.0
          %286 = vmatprep.subr.mxu0 0.0
          %287 = vmatpush1.msra.mxu0 0.0
          %288 = vmatprep.subr.mxu0 0.0
          %289 = vmatpush1.msra.mxu0 0.0
          %290 = vmatprep.subr.mxu0 0.0
          %291 = vmatpush1.msra.mxu0 0.0
          %292 = vmatprep.subr.mxu0 0.0
          %293 = vmatpush1.msra.mxu0 0.0
          %294 = vmatprep.subr.mxu0 0.0
          %295 = vmatpush1.msra.mxu0 0.0
          %296 = vmatprep.subr.mxu0 0.0
          %297 = vmatpush1.msra.mxu0 0.0
          %298 = vmatprep.subr.mxu0 0.0
          %299 = vmatpush1.msra.mxu0 0.0
          %300 = vmatprep.subr.mxu0 0.0
          %301 = vmatpush1.msra.mxu0 0.0
          %302 = vmatprep.subr.mxu0 0.0
          %303 = vmatpush1.msra.mxu0 0.0
          %304 = vmatprep.subr.mxu0 0.0
          %305 = vmatpush1.msra.mxu0 0.0
          %306 = vmatprep.subr.mxu0 0.0
          %307 = vmatpush1.msra.mxu0 0.0
          %308 = vmatprep.subr.mxu0 0.0
          %309 = vmatpush1.msra.mxu0 0.0
          %310 = vmatprep.subr.mxu0 0.0
          %311 = vmatpush1.msra.mxu0 0.0
          %312 = vmatprep.subr.mxu0 0.0
          %313 = vmatpush1.msra.mxu0 0.0
          %314 = vmatprep.subr.mxu0 0.0
          %v315 = vand.u32 %v278, 4294901760
          %316 = vmatpush1.msra.mxu0 %v315
          %317 = vmatprep.subr.mxu0 0.0
          %318 = vmatpush2.msra.mxu0 0.0
          %319 = vmatprep.subr.mxu0 0.0
          %320 = vmatpush2.msra.mxu0 0.0
          %321 = vmatprep.subr.mxu0 0.0
          %322 = vmatpush2.msra.mxu0 0.0
          %323 = vmatprep.subr.mxu0 0.0
          %324 = vmatpush2.msra.mxu0 0.0
          %325 = vmatprep.subr.mxu0 0.0
          %326 = vmatpush2.msra.mxu0 0.0
          %327 = vmatprep.subr.mxu0 0.0
          %328 = vmatpush2.msra.mxu0 0.0
          %329 = vmatprep.subr.mxu0 0.0
          %330 = vmatpush2.msra.mxu0 0.0
          %331 = vmatprep.subr.mxu0 0.0
          %332 = vmatpush2.msra.mxu0 0.0
          %333 = vmatprep.subr.mxu0 0.0
          %334 = vmatpush2.msra.mxu0 0.0
          %335 = vmatprep.subr.mxu0 0.0
          %336 = vmatpush2.msra.mxu0 0.0
          %337 = vmatprep.subr.mxu0 0.0
          %338 = vmatpush2.msra.mxu0 0.0
          %339 = vmatprep.subr.mxu0 0.0
          %340 = vmatpush2.msra.mxu0 0.0
          %341 = vmatprep.subr.mxu0 0.0
          %342 = vmatpush2.msra.mxu0 0.0
          %343 = vmatprep.subr.mxu0 0.0
          %344 = vmatpush2.msra.mxu0 0.0
          %345 = vmatprep.subr.mxu0 0.0
          %346 = vmatpush2.msra.mxu0 0.0
          %347 = vmatprep.subr.mxu0 0.0
          %348 = vmatpush2.msra.mxu0 0.0
          %349 = vmatprep.mubr.f32.mxu0 0.0
          %v350 = vand.u32 %v282, 4294901760
          %v351 = vsub.f32 %v282, %v350
          %v352 = vand.u32 %v351, 4294901760
          %v353 = vsub.f32 %v351, %v352
          %v354 = vand.u32 %v353, 4294901760
          %355 = vmatmul.mubr.f32.gmra.mxu0 %v354
          %v356 = vpop.f32.mrf.mxu0
          %v357 = vadd.f32 0.0, %v356
          %v358 = vpop.f32.mrf.mxu0
          %359 = vdwg.mxu0
          %360 = vmatprep.subr.mxu0 0.0
          %361 = vmatpush1.msra.mxu0 0.0
          %362 = vmatprep.subr.mxu0 0.0
          %363 = vmatpush1.msra.mxu0 0.0
          %364 = vmatprep.subr.mxu0 0.0
          %365 = vmatpush1.msra.mxu0 0.0
          %366 = vmatprep.subr.mxu0 0.0
          %367 = vmatpush1.msra.mxu0 0.0
          %368 = vmatprep.subr.mxu0 0.0
          %369 = vmatpush1.msra.mxu0 0.0
          %370 = vmatprep.subr.mxu0 0.0
          %371 = vmatpush1.msra.mxu0 0.0
          %372 = vmatprep.subr.mxu0 0.0
          %373 = vmatpush1.msra.mxu0 0.0
          %374 = vmatprep.subr.mxu0 0.0
          %375 = vmatpush1.msra.mxu0 0.0
          %376 = vmatprep.subr.mxu0 0.0
          %377 = vmatpush1.msra.mxu0 0.0
          %378 = vmatprep.subr.mxu0 0.0
          %379 = vmatpush1.msra.mxu0 0.0
          %380 = vmatprep.subr.mxu0 0.0
          %381 = vmatpush1.msra.mxu0 0.0
          %382 = vmatprep.subr.mxu0 0.0
          %383 = vmatpush1.msra.mxu0 0.0
          %384 = vmatprep.subr.mxu0 0.0
          %385 = vmatpush1.msra.mxu0 0.0
          %386 = vmatprep.subr.mxu0 0.0
          %387 = vmatpush1.msra.mxu0 0.0
          %388 = vmatprep.subr.mxu0 0.0
          %389 = vmatpush1.msra.mxu0 0.0
          %390 = vmatprep.subr.mxu0 0.0
          %v391 = vand.u32 %v278, 4294901760
          %v392 = vsub.f32 %v278, %v391
          %v393 = vand.u32 %v392, 4294901760
          %v394 = vsub.f32 %v392, %v393
          %v395 = vand.u32 %v394, 4294901760
          %396 = vmatpush1.msra.mxu0 %v395
          %397 = vmatprep.subr.mxu0 0.0
          %398 = vmatpush2.msra.mxu0 0.0
          %399 = vmatprep.subr.mxu0 0.0
          %400 = vmatpush2.msra.mxu0 0.0
          %401 = vmatprep.subr.mxu0 0.0
          %402 = vmatpush2.msra.mxu0 0.0
          %403 = vmatprep.subr.mxu0 0.0
          %404 = vmatpush2.msra.mxu0 0.0
          %405 = vmatprep.subr.mxu0 0.0
          %406 = vmatpush2.msra.mxu0 0.0
          %407 = vmatprep.subr.mxu0 0.0
          %408 = vmatpush2.msra.mxu0 0.0
          %409 = vmatprep.subr.mxu0 0.0
          %410 = vmatpush2.msra.mxu0 0.0
          %411 = vmatprep.subr.mxu0 0.0
          %412 = vmatpush2.msra.mxu0 0.0
          %413 = vmatprep.subr.mxu0 0.0
          %414 = vmatpush2.msra.mxu0 0.0
          %415 = vmatprep.subr.mxu0 0.0
          %416 = vmatpush2.msra.mxu0 0.0
          %417 = vmatprep.subr.mxu0 0.0
          %418 = vmatpush2.msra.mxu0 0.0
          %419 = vmatprep.subr.mxu0 0.0
          %420 = vmatpush2.msra.mxu0 0.0
          %421 = vmatprep.subr.mxu0 0.0
          %422 = vmatpush2.msra.mxu0 0.0
          %423 = vmatprep.subr.mxu0 0.0
          %424 = vmatpush2.msra.mxu0 0.0
          %425 = vmatprep.subr.mxu0 0.0
          %426 = vmatpush2.msra.mxu0 0.0
          %427 = vmatprep.subr.mxu0 0.0
          %428 = vmatpush2.msra.mxu0 0.0
          %429 = vmatprep.mubr.f32.mxu0 0.0
          %v430 = vand.u32 %v282, 4294901760
          %431 = vmatmul.mubr.f32.gmra.mxu0 %v430
          %v432 = vpop.f32.mrf.mxu0
          %v433 = vadd.f32 %v357, %v432
          %v434 = vpop.f32.mrf.mxu0
          %435 = vdwg.mxu0
          %436 = vmatprep.subr.mxu0 0.0
          %437 = vmatpush1.msra.mxu0 0.0
          %438 = vmatprep.subr.mxu0 0.0
          %439 = vmatpush1.msra.mxu0 0.0
          %440 = vmatprep.subr.mxu0 0.0
          %441 = vmatpush1.msra.mxu0 0.0
          %442 = vmatprep.subr.mxu0 0.0
          %443 = vmatpush1.msra.mxu0 0.0
          %444 = vmatprep.subr.mxu0 0.0
          %445 = vmatpush1.msra.mxu0 0.0
          %446 = vmatprep.subr.mxu0 0.0
          %447 = vmatpush1.msra.mxu0 0.0
          %448 = vmatprep.subr.mxu0 0.0
          %449 = vmatpush1.msra.mxu0 0.0
          %450 = vmatprep.subr.mxu0 0.0
          %451 = vmatpush1.msra.mxu0 0.0
          %452 = vmatprep.subr.mxu0 0.0
          %453 = vmatpush1.msra.mxu0 0.0
          %454 = vmatprep.subr.mxu0 0.0
          %455 = vmatpush1.msra.mxu0 0.0
          %456 = vmatprep.subr.mxu0 0.0
          %457 = vmatpush1.msra.mxu0 0.0
          %458 = vmatprep.subr.mxu0 0.0
          %459 = vmatpush1.msra.mxu0 0.0
          %460 = vmatprep.subr.mxu0 0.0
          %461 = vmatpush1.msra.mxu0 0.0
          %462 = vmatprep.subr.mxu0 0.0
          %463 = vmatpush1.msra.mxu0 0.0
          %464 = vmatprep.subr.mxu0 0.0
          %465 = vmatpush1.msra.mxu0 0.0
          %466 = vmatprep.subr.mxu0 0.0
          %v467 = vand.u32 %v278, 4294901760
          %v468 = vsub.f32 %v278, %v467
          %469 = vmatpush1.msra.mxu0 %v468
          %470 = vmatprep.subr.mxu0 0.0
          %471 = vmatpush2.msra.mxu0 0.0
          %472 = vmatprep.subr.mxu0 0.0
          %473 = vmatpush2.msra.mxu0 0.0
          %474 = vmatprep.subr.mxu0 0.0
          %475 = vmatpush2.msra.mxu0 0.0
          %476 = vmatprep.subr.mxu0 0.0
          %477 = vmatpush2.msra.mxu0 0.0
          %478 = vmatprep.subr.mxu0 0.0
          %479 = vmatpush2.msra.mxu0 0.0
          %480 = vmatprep.subr.mxu0 0.0
          %481 = vmatpush2.msra.mxu0 0.0
          %482 = vmatprep.subr.mxu0 0.0
          %483 = vmatpush2.msra.mxu0 0.0
          %484 = vmatprep.subr.mxu0 0.0
          %485 = vmatpush2.msra.mxu0 0.0
          %486 = vmatprep.subr.mxu0 0.0
          %487 = vmatpush2.msra.mxu0 0.0
          %488 = vmatprep.subr.mxu0 0.0
          %489 = vmatpush2.msra.mxu0 0.0
          %490 = vmatprep.subr.mxu0 0.0
          %491 = vmatpush2.msra.mxu0 0.0
          %492 = vmatprep.subr.mxu0 0.0
          %493 = vmatpush2.msra.mxu0 0.0
          %494 = vmatprep.subr.mxu0 0.0
          %495 = vmatpush2.msra.mxu0 0.0
          %496 = vmatprep.subr.mxu0 0.0
          %497 = vmatpush2.msra.mxu0 0.0
          %498 = vmatprep.subr.mxu0 0.0
          %499 = vmatpush2.msra.mxu0 0.0
          %500 = vmatprep.subr.mxu0 0.0
          %501 = vmatpush2.msra.mxu0 0.0
          %502 = vmatprep.mubr.f32.mxu0 0.0
          %v503 = vand.u32 %v282, 4294901760
          %v504 = vsub.f32 %v282, %v503
          %505 = vmatmul.mubr.f32.gmra.mxu0 %v504
          %v506 = vpop.f32.mrf.mxu0
          %v507 = vadd.f32 %v433, %v506
          %v508 = vpop.f32.mrf.mxu0
          %509 = vdwg.mxu0
          %510 = vmatprep.subr.mxu0 0.0
          %511 = vmatpush1.msra.mxu0 0.0
          %512 = vmatprep.subr.mxu0 0.0
          %513 = vmatpush1.msra.mxu0 0.0
          %514 = vmatprep.subr.mxu0 0.0
          %515 = vmatpush1.msra.mxu0 0.0
          %516 = vmatprep.subr.mxu0 0.0
          %517 = vmatpush1.msra.mxu0 0.0
          %518 = vmatprep.subr.mxu0 0.0
          %519 = vmatpush1.msra.mxu0 0.0
          %520 = vmatprep.subr.mxu0 0.0
          %521 = vmatpush1.msra.mxu0 0.0
          %522 = vmatprep.subr.mxu0 0.0
          %523 = vmatpush1.msra.mxu0 0.0
          %524 = vmatprep.subr.mxu0 0.0
          %525 = vmatpush1.msra.mxu0 0.0
          %526 = vmatprep.subr.mxu0 0.0
          %527 = vmatpush1.msra.mxu0 0.0
          %528 = vmatprep.subr.mxu0 0.0
          %529 = vmatpush1.msra.mxu0 0.0
          %530 = vmatprep.subr.mxu0 0.0
          %531 = vmatpush1.msra.mxu0 0.0
          %532 = vmatprep.subr.mxu0 0.0
          %533 = vmatpush1.msra.mxu0 0.0
          %534 = vmatprep.subr.mxu0 0.0
          %535 = vmatpush1.msra.mxu0 0.0
          %536 = vmatprep.subr.mxu0 0.0
          %537 = vmatpush1.msra.mxu0 0.0
          %538 = vmatprep.subr.mxu0 0.0
          %539 = vmatpush1.msra.mxu0 0.0
          %540 = vmatprep.subr.mxu0 0.0
          %v541 = vand.u32 %v278, 4294901760
          %542 = vmatpush1.msra.mxu0 %v541
          %543 = vmatprep.subr.mxu0 0.0
          %544 = vmatpush2.msra.mxu0 0.0
          %545 = vmatprep.subr.mxu0 0.0
          %546 = vmatpush2.msra.mxu0 0.0
          %547 = vmatprep.subr.mxu0 0.0
          %548 = vmatpush2.msra.mxu0 0.0
          %549 = vmatprep.subr.mxu0 0.0
          %550 = vmatpush2.msra.mxu0 0.0
          %551 = vmatprep.subr.mxu0 0.0
          %552 = vmatpush2.msra.mxu0 0.0
          %553 = vmatprep.subr.mxu0 0.0
          %554 = vmatpush2.msra.mxu0 0.0
          %555 = vmatprep.subr.mxu0 0.0
          %556 = vmatpush2.msra.mxu0 0.0
          %557 = vmatprep.subr.mxu0 0.0
          %558 = vmatpush2.msra.mxu0 0.0
          %559 = vmatprep.subr.mxu0 0.0
          %560 = vmatpush2.msra.mxu0 0.0
          %561 = vmatprep.subr.mxu0 0.0
          %562 = vmatpush2.msra.mxu0 0.0
          %563 = vmatprep.subr.mxu0 0.0
          %564 = vmatpush2.msra.mxu0 0.0
          %565 = vmatprep.subr.mxu0 0.0
          %566 = vmatpush2.msra.mxu0 0.0
          %567 = vmatprep.subr.mxu0 0.0
          %568 = vmatpush2.msra.mxu0 0.0
          %569 = vmatprep.subr.mxu0 0.0
          %570 = vmatpush2.msra.mxu0 0.0
          %571 = vmatprep.subr.mxu0 0.0
          %572 = vmatpush2.msra.mxu0 0.0
          %573 = vmatprep.subr.mxu0 0.0
          %574 = vmatpush2.msra.mxu0 0.0
          %575 = vmatprep.mubr.f32.mxu0 0.0
          %v576 = vand.u32 %v282, 4294901760
          %v577 = vsub.f32 %v282, %v576
          %v578 = vand.u32 %v577, 4294901760
          %579 = vmatmul.mubr.f32.gmra.mxu0 %v578
          %v580 = vpop.f32.mrf.mxu0
          %v581 = vadd.f32 %v507, %v580
          %v582 = vpop.f32.mrf.mxu0
          %583 = vdwg.mxu0
          %584 = vmatprep.subr.mxu0 0.0
          %585 = vmatpush1.msra.mxu0 0.0
          %586 = vmatprep.subr.mxu0 0.0
          %587 = vmatpush1.msra.mxu0 0.0
          %588 = vmatprep.subr.mxu0 0.0
          %589 = vmatpush1.msra.mxu0 0.0
          %590 = vmatprep.subr.mxu0 0.0
          %591 = vmatpush1.msra.mxu0 0.0
          %592 = vmatprep.subr.mxu0 0.0
          %593 = vmatpush1.msra.mxu0 0.0
          %594 = vmatprep.subr.mxu0 0.0
          %595 = vmatpush1.msra.mxu0 0.0
          %596 = vmatprep.subr.mxu0 0.0
          %597 = vmatpush1.msra.mxu0 0.0
          %598 = vmatprep.subr.mxu0 0.0
          %599 = vmatpush1.msra.mxu0 0.0
          %600 = vmatprep.subr.mxu0 0.0
          %601 = vmatpush1.msra.mxu0 0.0
          %602 = vmatprep.subr.mxu0 0.0
          %603 = vmatpush1.msra.mxu0 0.0
          %604 = vmatprep.subr.mxu0 0.0
          %605 = vmatpush1.msra.mxu0 0.0
          %606 = vmatprep.subr.mxu0 0.0
          %607 = vmatpush1.msra.mxu0 0.0
          %608 = vmatprep.subr.mxu0 0.0
          %609 = vmatpush1.msra.mxu0 0.0
          %610 = vmatprep.subr.mxu0 0.0
          %611 = vmatpush1.msra.mxu0 0.0
          %612 = vmatprep.subr.mxu0 0.0
          %613 = vmatpush1.msra.mxu0 0.0
          %614 = vmatprep.subr.mxu0 0.0
          %v615 = vand.u32 %v278, 4294901760
          %v616 = vsub.f32 %v278, %v615
          %v617 = vand.u32 %v616, 4294901760
          %618 = vmatpush1.msra.mxu0 %v617
          %619 = vmatprep.subr.mxu0 0.0
          %620 = vmatpush2.msra.mxu0 0.0
          %621 = vmatprep.subr.mxu0 0.0
          %622 = vmatpush2.msra.mxu0 0.0
          %623 = vmatprep.subr.mxu0 0.0
          %624 = vmatpush2.msra.mxu0 0.0
          %625 = vmatprep.subr.mxu0 0.0
          %626 = vmatpush2.msra.mxu0 0.0
          %627 = vmatprep.subr.mxu0 0.0
          %628 = vmatpush2.msra.mxu0 0.0
          %629 = vmatprep.subr.mxu0 0.0
          %630 = vmatpush2.msra.mxu0 0.0
          %631 = vmatprep.subr.mxu0 0.0
          %632 = vmatpush2.msra.mxu0 0.0
          %633 = vmatprep.subr.mxu0 0.0
          %634 = vmatpush2.msra.mxu0 0.0
          %635 = vmatprep.subr.mxu0 0.0
          %636 = vmatpush2.msra.mxu0 0.0
          %637 = vmatprep.subr.mxu0 0.0
          %638 = vmatpush2.msra.mxu0 0.0
          %639 = vmatprep.subr.mxu0 0.0
          %640 = vmatpush2.msra.mxu0 0.0
          %641 = vmatprep.subr.mxu0 0.0
          %642 = vmatpush2.msra.mxu0 0.0
          %643 = vmatprep.subr.mxu0 0.0
          %644 = vmatpush2.msra.mxu0 0.0
          %645 = vmatprep.subr.mxu0 0.0
          %646 = vmatpush2.msra.mxu0 0.0
          %647 = vmatprep.subr.mxu0 0.0
          %648 = vmatpush2.msra.mxu0 0.0
          %649 = vmatprep.subr.mxu0 0.0
          %650 = vmatpush2.msra.mxu0 0.0
          %651 = vmatprep.mubr.f32.mxu0 0.0
          %v652 = vand.u32 %v282, 4294901760
          %653 = vmatmul.mubr.f32.gmra.mxu0 %v652
          %v654 = vpop.f32.mrf.mxu0
          %v655 = vadd.f32 %v581, %v654
          %v656 = vpop.f32.mrf.mxu0
          %657 = vdwg.mxu0
          %658 = vmatprep.subr.mxu0 0.0
          %659 = vmatpush1.msra.mxu0 0.0
          %660 = vmatprep.subr.mxu0 0.0
          %661 = vmatpush1.msra.mxu0 0.0
          %662 = vmatprep.subr.mxu0 0.0
          %663 = vmatpush1.msra.mxu0 0.0
          %664 = vmatprep.subr.mxu0 0.0
          %665 = vmatpush1.msra.mxu0 0.0
          %666 = vmatprep.subr.mxu0 0.0
          %667 = vmatpush1.msra.mxu0 0.0
          %668 = vmatprep.subr.mxu0 0.0
          %669 = vmatpush1.msra.mxu0 0.0
          %670 = vmatprep.subr.mxu0 0.0
          %671 = vmatpush1.msra.mxu0 0.0
          %672 = vmatprep.subr.mxu0 0.0
          %673 = vmatpush1.msra.mxu0 0.0
          %674 = vmatprep.subr.mxu0 0.0
          %675 = vmatpush1.msra.mxu0 0.0
          %676 = vmatprep.subr.mxu0 0.0
          %677 = vmatpush1.msra.mxu0 0.0
          %678 = vmatprep.subr.mxu0 0.0
          %679 = vmatpush1.msra.mxu0 0.0
          %680 = vmatprep.subr.mxu0 0.0
          %681 = vmatpush1.msra.mxu0 0.0
          %682 = vmatprep.subr.mxu0 0.0
          %683 = vmatpush1.msra.mxu0 0.0
          %684 = vmatprep.subr.mxu0 0.0
          %685 = vmatpush1.msra.mxu0 0.0
          %686 = vmatprep.subr.mxu0 0.0
          %687 = vmatpush1.msra.mxu0 0.0
          %688 = vmatprep.subr.mxu0 0.0
          %v689 = vand.u32 %v278, 4294901760
          %690 = vmatpush1.msra.mxu0 %v689
          %691 = vmatprep.subr.mxu0 0.0
          %692 = vmatpush2.msra.mxu0 0.0
          %693 = vmatprep.subr.mxu0 0.0
          %694 = vmatpush2.msra.mxu0 0.0
          %695 = vmatprep.subr.mxu0 0.0
          %696 = vmatpush2.msra.mxu0 0.0
          %697 = vmatprep.subr.mxu0 0.0
          %698 = vmatpush2.msra.mxu0 0.0
          %699 = vmatprep.subr.mxu0 0.0
          %700 = vmatpush2.msra.mxu0 0.0
          %701 = vmatprep.subr.mxu0 0.0
          %702 = vmatpush2.msra.mxu0 0.0
          %703 = vmatprep.subr.mxu0 0.0
          %704 = vmatpush2.msra.mxu0 0.0
          %705 = vmatprep.subr.mxu0 0.0
          %706 = vmatpush2.msra.mxu0 0.0
          %707 = vmatprep.subr.mxu0 0.0
          %708 = vmatpush2.msra.mxu0 0.0
          %709 = vmatprep.subr.mxu0 0.0
          %710 = vmatpush2.msra.mxu0 0.0
          %711 = vmatprep.subr.mxu0 0.0
          %712 = vmatpush2.msra.mxu0 0.0
          %713 = vmatprep.subr.mxu0 0.0
          %714 = vmatpush2.msra.mxu0 0.0
          %715 = vmatprep.subr.mxu0 0.0
          %716 = vmatpush2.msra.mxu0 0.0
          %717 = vmatprep.subr.mxu0 0.0
          %718 = vmatpush2.msra.mxu0 0.0
          %719 = vmatprep.subr.mxu0 0.0
          %720 = vmatpush2.msra.mxu0 0.0
          %721 = vmatprep.subr.mxu0 0.0
          %722 = vmatpush2.msra.mxu0 0.0
          %723 = vmatprep.mubr.f32.mxu0 0.0
          %v724 = vand.u32 %v282, 4294901760
          %725 = vmatmul.mubr.f32.gmra.mxu0 %v724
          %v726 = vpop.f32.mrf.mxu0
          %v727 = vadd.f32 %v655, %v726
          %v728 = vpop.f32.mrf.mxu0
          %729 = vdwg.mxu0
          %v730 = vmax.f32 %v727, 1e-30
          %v731 = vlog2.pop %v730
          %v732 = vmul.f32 %v731, 0.6931472
          %v733 = vadd.f32 %v732, %v275
          %v734 = vld [vmem:[%s3] sm:$0xff]
          %736 = vset.pattern.permute.xlu0 0
          %737 = vperm.xlu0 %736, %v734
          %v738 = vpop.permute.xlu0 %737
          %v740 = vadd.f32 %v733, %v738
          %v741 = vld [vmem:[%s223] sm:$0xff]
          %v742 = vadd.f32 %v740, %v741
          %v743 = vld [vmem:[%s258] sm:$0x1]
          %vm744 = vcmp.gt.f32.partialorder %v743, 0.5
          %v745 = vsel %vm744, 1, 0
          %v746 = vlaneseq
          %v747 = vshrl.u32 %v746, 7
          %v748 = vsub.s32 0, %v747
          %v749 = vrot.slane %v745, %v748
          %vm750 = vcmp.eq.s32.totalorder %v749, 1
          %v751 = vsel %vm750, %v742, %v269
          %752 = vst [vmem:[#allocation2] sm:$0xff] %v751
        $region52: #{tpu_custom_call.1} parent=35 // pred_fallthru
          _
        %p753 = scmp.eq.s32.totalorder %s25, 7
        // Predicated region
        $region53: #{tpu_custom_call.1} parent=35 // pred_check
          %p754 = pneg %p753
        $region54: #{tpu_custom_call.1} parent=35 // pred_check_branch
          %756 = sbr.rel (%p754) target = $region56
        $region55: #{tpu_custom_call.1} parent=35 // pred_region
          %v757 = vld [vmem:[#allocation2] sm:$0xff]
          %v758 = vrot.slane %v757, 4
          %v759 = vmax.f32 %v757, %v758
          %v760 = vrot.slane %v759, 2
          %v761 = vmax.f32 %v759, %v760
          %v762 = vrot.slane %v761, 1
          %v763 = vmax.f32 %v761, %v762
          %v764 = vsub.f32 %v757, %v763
          %v765 = vmul.f32 %v764, 1.442695
          %v766 = vpow.pop %v765
          %v767 = vrot.slane %v766, 4
          %v768 = vadd.f32 %v766, %v767
          %v769 = vrot.slane %v768, 2
          %v770 = vadd.f32 %v768, %v769
          %v771 = vrot.slane %v770, 1
          %v772 = vadd.f32 %v770, %v771
          %v773 = vlog2.pop %v772
          %v774 = vmul.f32 %v773, 0.6931472
          %v775 = vadd.f32 %v763, %v774
          %776 = vst [vmem:[#allocation8] sm:$0x1] %v775
        $region56: #{tpu_custom_call.1} parent=35 // pred_fallthru
          _
        // Predicated region
        $region57: #{tpu_custom_call.1} parent=35 // pred_check
          %p777 = pneg %p148
        $region58: #{tpu_custom_call.1} parent=35 // pred_check_branch
          %779 = sbr.rel (%p777) target = $region60
        $region59: #{tpu_custom_call.1} parent=35 // pred_region
          %s781 = ssub.s32 16, 16
          %782 = vsyncadd [#allocation5], %s781
          %s783 = smul.addr %s24, 16
          %s784 = scalar_lea.hbm %s4, %s783
          %s786 = sshll.u32 [#allocation8], 4
          %s787 = int_to_ptr.vmem [resolvable:$true] %s786
          %789 = dma.vmem_to_hbm [thread:$0]  %s787, 16, %s784, [#allocation5]
        $region60: #{tpu_custom_call.1} parent=35 // pred_fallthru
          _
        // Predicated region
        $region61: #{tpu_custom_call.1} parent=35 // pred_check
          %p790 = pneg %p148
        $region62: #{tpu_custom_call.1} parent=35 // pred_check_branch
          %792 = sbr.rel (%p790) target = $region64
        $region63: #{tpu_custom_call.1} parent=35 // pred_region
          %793 = dma.done [#allocation5], 16
        $region64: #{tpu_custom_call.1} parent=35 // pred_fallthru
          _
      $region36: #{tpu_custom_call.1} parent=5 // pred_fallthru
        _
      %p794 = scmp.le.s32.totalorder 2, %s15
      // Predicated region
      $region65: #{tpu_custom_call.1} parent=5 // pred_check
        %p795 = pneg %p794
      $region66: #{tpu_custom_call.1} parent=5 // pred_check_branch
        %797 = sbr.rel (%p795) target = $region68
      $region67: #{tpu_custom_call.1} parent=5 // pred_region
        %s798 = ssub.s32 %s15, 2
      $region68: #{tpu_custom_call.1} parent=5 // pred_fallthru
        _
    $region6: #{tpu_custom_call.1} parent=1 // loop_footer
      %s19 = sadd.s32 1, %s15
    $region7: #{tpu_custom_call.1} parent=1 // loop_footer_branch
      %14 = sbr.rel target = $region3
    $region8: #{tpu_custom_call.1} parent=1 // loop_exit
      _
    %799 = vsyncpa [#allocation4], 1
    %s800 = scalar_lea.sflag [#allocation4], 1
    %801 = vsyncpa %s800, 1
    %802 = vsyncpa [#allocation7], 1
    %803 = vsyncpa [#allocation5], 1
    %s804 = scalar_lea.sflag [#allocation5], 1
    %805 = vsyncpa %s804, 1

</llo_original>
